<compile_context>
chip_gen: v5e
topology: v5e:2x2
jax: 0.10.0
libtpu: 0.0.40
codegen_flags: <defaults>
</compile_context>

<pallas_src>
import functools

import jax
import jax.numpy as jnp
from jax.experimental import pallas as pl
from jax.experimental.pallas import tpu as pltpu

_PRIME_X = 1
_PRIME_Y = 19349663  # int32-safe spatial-hash prime


def _hash2d(xi, yi, table_size):
    """Spatial hash of integer grid coords -> index in [0, table_size)."""
    h = jnp.bitwise_xor(xi * _PRIME_X, yi * _PRIME_Y)
    return jnp.bitwise_and(h, table_size - 1)


def _make_kernel(layout):
    """Builds the Pallas kernel body for a static multi-resolution layout."""

    def kernel(scales_ref, pos_ref, *rest):
        tbl_refs = rest[:-1]          # one (DIM_PAD, T_lvl) table per level
        out_ref = rest[-1]            # (DIM_PAD, block)
        blk = pos_ref.shape[1]        # points on lanes

        x = pos_ref[0:1, :]           # (1, BLK)
        y = pos_ref[1:2, :]           # (1, BLK)

        acc = None
        for lvl, (hash_size, cell_size, _dim) in enumerate(layout):
            table_size = 2 ** hash_size
            s = scales_ref[lvl]                       # softmaxed level weight (SMEM scalar)

            # Same op as the reference (divide), so floor() behaviour matches
            # bit-exactly for any cell_size.
            sx = x / jnp.float32(cell_size)
            sy = y / jnp.float32(cell_size)
            x0f = jnp.floor(sx)
            y0f = jnp.floor(sy)
            wx = sx - x0f                             # (1, BLK)
            wy = sy - y0f
            x0 = x0f.astype(jnp.int32)
            y0 = y0f.astype(jnp.int32)

            # Per-level slab iota: compares only run over this level's rows.
            row_iota = jax.lax.broadcasted_iota(jnp.int32, (table_size, blk), 0)

            # Weighted one-hot selector for this level:
            #   sel[t, n] = sum_corners  s * bilinear_w_c(n) * [hash_c(n) == t]
            # First corner overwrites (no zeros init pass); accumulation keeps
            # corner hash-collisions exact.
            sel = None
            for cx, cy in ((0, 0), (0, 1), (1, 0), (1, 1)):
                h = _hash2d(x0 + cx, y0 + cy, table_size)          # (1, BLK) int32
                w = ((wx if cx == 1 else (1.0 - wx)) *
                     (wy if cy == 1 else (1.0 - wy))) * s          # (1, BLK)
                contrib = jnp.where(h == row_iota, w, 0.0)         # (T_lvl, BLK)
                sel = contrib if sel is None else sel + contrib

            # Per-level MXU matmul; levels occupy disjoint rows of the padded
            # LHS, so summing the (DIM_PAD, BLK) results is exact.
            feat = jnp.dot(tbl_refs[lvl][...], sel,
                           preferred_element_type=jnp.float32)     # (DIM_PAD, BLK)
            acc = feat if acc is None else acc + feat

        # Single lane-dense, full-sublane (DIM_PAD = multiple of 8) store.
        out_ref[...] = acc.astype(out_ref.dtype)

    return kernel


def pack_tables(tables, layout):
    """One-time (static-parameter) packing: per level (DIM_PAD, T_lvl) f32 LHS
    whose rows [row_off, row_off+dim) hold table.T and the rest are zero."""
    total_dim = sum(d for _, _, d in layout)
    dim_pad = ((total_dim + 7) // 8) * 8
    packed = []
    row = 0
    for tbl, (hs, _, dim) in zip(tables, layout):
        t = 2 ** hs
        m = jnp.zeros((dim_pad, t), jnp.float32)
        m = m.at[row:row + dim, :].set(tbl.astype(jnp.float32).T)
        packed.append(m)
        row += dim
    return packed


@functools.partial(jax.jit, static_argnames=("layout", "block"))
def mrhg2d_forward(positions, packed_tables, level_weights, layout, block=128):
    """Pallas forward of MRHG2D. positions: (N, 2) f32 -> (N, sum(dims)) f32."""
    n = positions.shape[0]
    n_levels = len(layout)
    total_dim = sum(d for _, _, d in layout)
    dim_pad = packed_tables[0].shape[0]

    # Remainder handling: pad the point axis to a block multiple; padded points
    # still hash harmlessly and their output columns are sliced off below.
    n_pad = ((n + block - 1) // block) * block
    pos = positions.astype(jnp.float32)
    if n_pad != n:
        pos = jnp.pad(pos, ((0, n_pad - n), (0, 0)))
    pos_t = pos.T                                             # (2, N_pad): points on lanes

    # Tiny per-call glue, jitted together with the pallas_call.
    scales = jax.nn.softmax(level_weights.astype(jnp.float32))  # (L,)

    grid_spec = pltpu.PrefetchScalarGridSpec(
        num_scalar_prefetch=0,
        grid=(n_pad // block,),
        in_specs=[
            # Softmaxed level weights: scalars in SMEM.
            pl.BlockSpec(memory_space=pltpu.MemorySpace.SMEM),
            # Positions^T tile: (2, block), lane-dense.
            pl.BlockSpec((2, block), lambda i: (0, i)),
        ] + [
            # Per-level padded transposed table: full, constant block index.
            pl.BlockSpec((dim_pad, 2 ** hs), lambda i: (0, 0))
            for hs, _, _ in layout
        ],
        out_specs=pl.BlockSpec((dim_pad, block), lambda i: (0, i)),
    )

    out_t = pl.pallas_call(
        _make_kernel(layout),
        out_shape=jax.ShapeDtypeStruct((dim_pad, n_pad), jnp.float32),
        grid_spec=grid_spec,
        compiler_params=pltpu.CompilerParams(
            dimension_semantics=("parallel",)),
    )(scales, pos_t, *packed_tables)

    # Back to the module's (N, total_dim) = torch.cat(features, dim=1) layout.
    return out_t[:total_dim, :n].T


def mrhg2d_reference(positions, tables, level_weights, layout):
    """Pure-JAX reference with identical semantics."""
    scales = jax.nn.softmax(level_weights.astype(jnp.float32))
    feats = []
    for lvl, (hash_size, cell_size, dim) in enumerate(layout):
        table_size = 2 ** hash_size
        sx = positions[:, 0] / jnp.float32(cell_size)
        sy = positions[:, 1] / jnp.float32(cell_size)
        x0f = jnp.floor(sx)
        y0f = jnp.floor(sy)
        wx = sx - x0f
        wy = sy - y0f
        x0 = x0f.astype(jnp.int32)
        y0 = y0f.astype(jnp.int32)
        acc = jnp.zeros((positions.shape[0], dim), jnp.float32)
        for cx, cy in ((0, 0), (0, 1), (1, 0), (1, 1)):
            h = _hash2d(x0 + cx, y0 + cy, table_size)
            feat = tables[lvl][h]  # gather
            w = (wx if cx == 1 else (1.0 - wx)) * (wy if cy == 1 else (1.0 - wy))
            acc = acc + w[:, None] * feat
        feats.append(scales[lvl] * acc)
    return jnp.concatenate(feats, axis=1)


if __name__ == "__main__":
    # Small multi-resolution layout: ((hash_size, cell_size, dim), ...) — static.
    layout = ((8, 16, 2), (7, 8, 2))
    total_dim = sum(d for _, _, d in layout)

    key = jax.random.PRNGKey(0)
    k_pos, k_lvl, k_tbl = jax.random.split(key, 3)

    # Non-multiple N exercises the remainder/padding path; block=128 -> 8 grid
    # steps (>= 4 per TensorCore on v7x).
    n = 1000
    positions = jax.random.uniform(k_pos, (n, 2), jnp.float32, 0.0, 64.0)
    # Deterministic "parameters" (torch.rand / hash-table embeddings analogue).
    level_weights = jax.random.uniform(k_lvl, (len(layout),), jnp.float32)
    table_keys = jax.random.split(k_tbl, len(layout))
    tables = [
        jax.random.uniform(tk, (2 ** hs, dim), jnp.float32, -0.1, 0.1)
        for tk, (hs, _, dim) in zip(table_keys, layout)
    ]

    # Static-parameter packing done once, outside the per-call path.
    packed_tables = pack_tables(tables, layout)

    out = mrhg2d_forward(positions, packed_tables, level_weights, layout,
                         block=128)
    out = jax.block_until_ready(out)

    ref = mrhg2d_reference(positions, tables, level_weights, layout)
    assert out.shape == (n, total_dim), out.shape
    if not jnp.allclose(out, ref, rtol=1e-5, atol=1e-5):
        raise AssertionError("Pallas MRHG2D output mismatch vs JAX reference")

    print("KERNEL_OK")
</pallas_src>

<mosaic_0001>
module attributes {stable_mosaic.version = 11 : i64} {
  func.func @kernel(%arg0: i32, %arg1: memref<2xf32, #tpu.memory_space<smem>>, %arg2: memref<2x128xf32, #tpu.memory_space<vmem>>, %arg3: memref<8x256xf32, #tpu.memory_space<vmem>>, %arg4: memref<8x128xf32, #tpu.memory_space<vmem>>, %arg5: memref<8x128xf32, #tpu.memory_space<vmem>>) attributes {dimension_semantics = [#tpu.dimension_semantics<parallel>], iteration_bounds = array<i64: 8>, scalar_prefetch = 0 : i64, scratch_operands = 0 : i64, tpu.core_type = #tpu.core_type<tc>, window_params = [{transform_indices = @transform_0, window_bounds = array<i64: 2>}, {transform_indices = @transform_1, window_bounds = array<i64: 2, 128>}, {pipeline_mode = #tpu.pipeline_mode<synchronous>, transform_indices = @transform_2, window_bounds = array<i64: 8, 256>}, {pipeline_mode = #tpu.pipeline_mode<synchronous>, transform_indices = @transform_3, window_bounds = array<i64: 8, 128>}, {transform_indices = @transform_4, window_bounds = array<i64: 8, 128>}]} {
    %c0 = arith.constant 0 : index
    %c0_0 = arith.constant 0 : index
    %0 = vector.load %arg2[%c0, %c0_0] : memref<2x128xf32, #tpu.memory_space<vmem>>, vector<1x128xf32>
    %c1 = arith.constant 1 : index
    %c0_1 = arith.constant 0 : index
    %1 = vector.load %arg2[%c1, %c0_1] : memref<2x128xf32, #tpu.memory_space<vmem>>, vector<1x128xf32>
    %c0_2 = arith.constant 0 : index
    %2 = memref.load %arg1[%c0_2] : memref<2xf32, #tpu.memory_space<smem>>
    %cst = arith.constant 1.600000e+01 : f32
    %3 = vector.broadcast %cst : f32 to vector<1x128xf32>
    %4 = arith.divf %0, %3 : vector<1x128xf32>
    %cst_3 = arith.constant 1.600000e+01 : f32
    %5 = vector.broadcast %cst_3 : f32 to vector<1x128xf32>
    %6 = arith.divf %1, %5 : vector<1x128xf32>
    %7 = math.floor %4 : vector<1x128xf32>
    %8 = math.floor %6 : vector<1x128xf32>
    %9 = arith.subf %4, %7 : vector<1x128xf32>
    %10 = arith.subf %6, %8 : vector<1x128xf32>
    %11 = arith.fptosi %7 : vector<1x128xf32> to vector<1x128xi32>
    %12 = arith.fptosi %8 : vector<1x128xf32> to vector<1x128xi32>
    %13 = tpu.iota {dimensions = array<i32: 0>} : vector<256x128xi32>
    %c0_i32 = arith.constant 0 : i32
    %14 = vector.broadcast %c0_i32 : i32 to vector<1x128xi32>
    %15 = arith.addi %11, %14 : vector<1x128xi32>
    %c0_i32_4 = arith.constant 0 : i32
    %16 = vector.broadcast %c0_i32_4 : i32 to vector<1x128xi32>
    %17 = arith.addi %12, %16 : vector<1x128xi32>
    %c1_i32 = arith.constant 1 : i32
    %18 = vector.broadcast %c1_i32 : i32 to vector<1x128xi32>
    %19 = arith.muli %15, %18 : vector<1x128xi32>
    %c19349663_i32 = arith.constant 19349663 : i32
    %20 = vector.broadcast %c19349663_i32 : i32 to vector<1x128xi32>
    %21 = arith.muli %17, %20 : vector<1x128xi32>
    %22 = arith.xori %19, %21 : vector<1x128xi32>
    %c255_i32 = arith.constant 255 : i32
    %23 = vector.broadcast %c255_i32 : i32 to vector<1x128xi32>
    %24 = arith.andi %22, %23 : vector<1x128xi32>
    %cst_5 = arith.constant 1.000000e+00 : f32
    %25 = vector.broadcast %cst_5 : f32 to vector<1x128xf32>
    %26 = arith.subf %25, %9 : vector<1x128xf32>
    %cst_6 = arith.constant 1.000000e+00 : f32
    %27 = vector.broadcast %cst_6 : f32 to vector<1x128xf32>
    %28 = arith.subf %27, %10 : vector<1x128xf32>
    %29 = arith.mulf %26, %28 : vector<1x128xf32>
    %30 = vector.broadcast %2 : f32 to vector<1x128xf32>
    %31 = arith.mulf %29, %30 : vector<1x128xf32>
    %32 = vector.broadcast %24 : vector<1x128xi32> to vector<256x128xi32>
    %33 = arith.cmpi eq, %32, %13 : vector<256x128xi32>
    %cst_7 = arith.constant 0.000000e+00 : f32
    %34 = vector.shape_cast %31 : vector<1x128xf32> to vector<1x128xf32>
    %35 = vector.broadcast %34 : vector<1x128xf32> to vector<256x128xf32>
    %36 = vector.broadcast %cst_7 : f32 to vector<256x128xf32>
    %37 = arith.select %33, %35, %36 : vector<256x128xi1>, vector<256x128xf32>
    %c0_i32_8 = arith.constant 0 : i32
    %38 = vector.broadcast %c0_i32_8 : i32 to vector<1x128xi32>
    %39 = arith.addi %11, %38 : vector<1x128xi32>
    %c1_i32_9 = arith.constant 1 : i32
    %40 = vector.broadcast %c1_i32_9 : i32 to vector<1x128xi32>
    %41 = arith.addi %12, %40 : vector<1x128xi32>
    %c1_i32_10 = arith.constant 1 : i32
    %42 = vector.broadcast %c1_i32_10 : i32 to vector<1x128xi32>
    %43 = arith.muli %39, %42 : vector<1x128xi32>
    %c19349663_i32_11 = arith.constant 19349663 : i32
    %44 = vector.broadcast %c19349663_i32_11 : i32 to vector<1x128xi32>
    %45 = arith.muli %41, %44 : vector<1x128xi32>
    %46 = arith.xori %43, %45 : vector<1x128xi32>
    %c255_i32_12 = arith.constant 255 : i32
    %47 = vector.broadcast %c255_i32_12 : i32 to vector<1x128xi32>
    %48 = arith.andi %46, %47 : vector<1x128xi32>
    %cst_13 = arith.constant 1.000000e+00 : f32
    %49 = vector.broadcast %cst_13 : f32 to vector<1x128xf32>
    %50 = arith.subf %49, %9 : vector<1x128xf32>
    %51 = arith.mulf %50, %10 : vector<1x128xf32>
    %52 = vector.broadcast %2 : f32 to vector<1x128xf32>
    %53 = arith.mulf %51, %52 : vector<1x128xf32>
    %54 = vector.broadcast %48 : vector<1x128xi32> to vector<256x128xi32>
    %55 = arith.cmpi eq, %54, %13 : vector<256x128xi32>
    %cst_14 = arith.constant 0.000000e+00 : f32
    %56 = vector.shape_cast %53 : vector<1x128xf32> to vector<1x128xf32>
    %57 = vector.broadcast %56 : vector<1x128xf32> to vector<256x128xf32>
    %58 = vector.broadcast %cst_14 : f32 to vector<256x128xf32>
    %59 = arith.select %55, %57, %58 : vector<256x128xi1>, vector<256x128xf32>
    %60 = arith.addf %37, %59 : vector<256x128xf32>
    %c1_i32_15 = arith.constant 1 : i32
    %61 = vector.broadcast %c1_i32_15 : i32 to vector<1x128xi32>
    %62 = arith.addi %11, %61 : vector<1x128xi32>
    %c0_i32_16 = arith.constant 0 : i32
    %63 = vector.broadcast %c0_i32_16 : i32 to vector<1x128xi32>
    %64 = arith.addi %12, %63 : vector<1x128xi32>
    %c1_i32_17 = arith.constant 1 : i32
    %65 = vector.broadcast %c1_i32_17 : i32 to vector<1x128xi32>
    %66 = arith.muli %62, %65 : vector<1x128xi32>
    %c19349663_i32_18 = arith.constant 19349663 : i32
    %67 = vector.broadcast %c19349663_i32_18 : i32 to vector<1x128xi32>
    %68 = arith.muli %64, %67 : vector<1x128xi32>
    %69 = arith.xori %66, %68 : vector<1x128xi32>
    %c255_i32_19 = arith.constant 255 : i32
    %70 = vector.broadcast %c255_i32_19 : i32 to vector<1x128xi32>
    %71 = arith.andi %69, %70 : vector<1x128xi32>
    %cst_20 = arith.constant 1.000000e+00 : f32
    %72 = vector.broadcast %cst_20 : f32 to vector<1x128xf32>
    %73 = arith.subf %72, %10 : vector<1x128xf32>
    %74 = arith.mulf %9, %73 : vector<1x128xf32>
    %75 = vector.broadcast %2 : f32 to vector<1x128xf32>
    %76 = arith.mulf %74, %75 : vector<1x128xf32>
    %77 = vector.broadcast %71 : vector<1x128xi32> to vector<256x128xi32>
    %78 = arith.cmpi eq, %77, %13 : vector<256x128xi32>
    %cst_21 = arith.constant 0.000000e+00 : f32
    %79 = vector.shape_cast %76 : vector<1x128xf32> to vector<1x128xf32>
    %80 = vector.broadcast %79 : vector<1x128xf32> to vector<256x128xf32>
    %81 = vector.broadcast %cst_21 : f32 to vector<256x128xf32>
    %82 = arith.select %78, %80, %81 : vector<256x128xi1>, vector<256x128xf32>
    %83 = arith.addf %60, %82 : vector<256x128xf32>
    %c1_i32_22 = arith.constant 1 : i32
    %84 = vector.broadcast %c1_i32_22 : i32 to vector<1x128xi32>
    %85 = arith.addi %11, %84 : vector<1x128xi32>
    %c1_i32_23 = arith.constant 1 : i32
    %86 = vector.broadcast %c1_i32_23 : i32 to vector<1x128xi32>
    %87 = arith.addi %12, %86 : vector<1x128xi32>
    %c1_i32_24 = arith.constant 1 : i32
    %88 = vector.broadcast %c1_i32_24 : i32 to vector<1x128xi32>
    %89 = arith.muli %85, %88 : vector<1x128xi32>
    %c19349663_i32_25 = arith.constant 19349663 : i32
    %90 = vector.broadcast %c19349663_i32_25 : i32 to vector<1x128xi32>
    %91 = arith.muli %87, %90 : vector<1x128xi32>
    %92 = arith.xori %89, %91 : vector<1x128xi32>
    %c255_i32_26 = arith.constant 255 : i32
    %93 = vector.broadcast %c255_i32_26 : i32 to vector<1x128xi32>
    %94 = arith.andi %92, %93 : vector<1x128xi32>
    %95 = arith.mulf %9, %10 : vector<1x128xf32>
    %96 = vector.broadcast %2 : f32 to vector<1x128xf32>
    %97 = arith.mulf %95, %96 : vector<1x128xf32>
    %98 = vector.broadcast %94 : vector<1x128xi32> to vector<256x128xi32>
    %99 = arith.cmpi eq, %98, %13 : vector<256x128xi32>
    %cst_27 = arith.constant 0.000000e+00 : f32
    %100 = vector.shape_cast %97 : vector<1x128xf32> to vector<1x128xf32>
    %101 = vector.broadcast %100 : vector<1x128xf32> to vector<256x128xf32>
    %102 = vector.broadcast %cst_27 : f32 to vector<256x128xf32>
    %103 = arith.select %99, %101, %102 : vector<256x128xi1>, vector<256x128xf32>
    %104 = arith.addf %83, %103 : vector<256x128xf32>
    %c0_28 = arith.constant 0 : index
    %c0_29 = arith.constant 0 : index
    %105 = vector.load %arg3[%c0_28, %c0_29] : memref<8x256xf32, #tpu.memory_space<vmem>>, vector<8x256xf32>
    %cst_30 = arith.constant dense<0.000000e+00> : vector<8x128xf32>
    %106 = tpu.matmul %105, %104, %cst_30 {dimension_numbers = #tpu.dot_dimension_numbers<[1], [0], [0], [1], [0, 0, 1, 1], [], []>} : vector<8x256xf32>, vector<256x128xf32>, vector<8x128xf32> -> vector<8x128xf32>
    %c1_31 = arith.constant 1 : index
    %107 = memref.load %arg1[%c1_31] : memref<2xf32, #tpu.memory_space<smem>>
    %cst_32 = arith.constant 8.000000e+00 : f32
    %108 = vector.broadcast %cst_32 : f32 to vector<1x128xf32>
    %109 = arith.divf %0, %108 : vector<1x128xf32>
    %cst_33 = arith.constant 8.000000e+00 : f32
    %110 = vector.broadcast %cst_33 : f32 to vector<1x128xf32>
    %111 = arith.divf %1, %110 : vector<1x128xf32>
    %112 = math.floor %109 : vector<1x128xf32>
    %113 = math.floor %111 : vector<1x128xf32>
    %114 = arith.subf %109, %112 : vector<1x128xf32>
    %115 = arith.subf %111, %113 : vector<1x128xf32>
    %116 = arith.fptosi %112 : vector<1x128xf32> to vector<1x128xi32>
    %117 = arith.fptosi %113 : vector<1x128xf32> to vector<1x128xi32>
    %118 = tpu.iota {dimensions = array<i32: 0>} : vector<128x128xi32>
    %c0_i32_34 = arith.constant 0 : i32
    %119 = vector.broadcast %c0_i32_34 : i32 to vector<1x128xi32>
    %120 = arith.addi %116, %119 : vector<1x128xi32>
    %c0_i32_35 = arith.constant 0 : i32
    %121 = vector.broadcast %c0_i32_35 : i32 to vector<1x128xi32>
    %122 = arith.addi %117, %121 : vector<1x128xi32>
    %c1_i32_36 = arith.constant 1 : i32
    %123 = vector.broadcast %c1_i32_36 : i32 to vector<1x128xi32>
    %124 = arith.muli %120, %123 : vector<1x128xi32>
    %c19349663_i32_37 = arith.constant 19349663 : i32
    %125 = vector.broadcast %c19349663_i32_37 : i32 to vector<1x128xi32>
    %126 = arith.muli %122, %125 : vector<1x128xi32>
    %127 = arith.xori %124, %126 : vector<1x128xi32>
    %c127_i32 = arith.constant 127 : i32
    %128 = vector.broadcast %c127_i32 : i32 to vector<1x128xi32>
    %129 = arith.andi %127, %128 : vector<1x128xi32>
    %cst_38 = arith.constant 1.000000e+00 : f32
    %130 = vector.broadcast %cst_38 : f32 to vector<1x128xf32>
    %131 = arith.subf %130, %114 : vector<1x128xf32>
    %cst_39 = arith.constant 1.000000e+00 : f32
    %132 = vector.broadcast %cst_39 : f32 to vector<1x128xf32>
    %133 = arith.subf %132, %115 : vector<1x128xf32>
    %134 = arith.mulf %131, %133 : vector<1x128xf32>
    %135 = vector.broadcast %107 : f32 to vector<1x128xf32>
    %136 = arith.mulf %134, %135 : vector<1x128xf32>
    %137 = vector.broadcast %129 : vector<1x128xi32> to vector<128x128xi32>
    %138 = arith.cmpi eq, %137, %118 : vector<128x128xi32>
    %cst_40 = arith.constant 0.000000e+00 : f32
    %139 = vector.shape_cast %136 : vector<1x128xf32> to vector<1x128xf32>
    %140 = vector.broadcast %139 : vector<1x128xf32> to vector<128x128xf32>
    %141 = vector.broadcast %cst_40 : f32 to vector<128x128xf32>
    %142 = arith.select %138, %140, %141 : vector<128x128xi1>, vector<128x128xf32>
    %c0_i32_41 = arith.constant 0 : i32
    %143 = vector.broadcast %c0_i32_41 : i32 to vector<1x128xi32>
    %144 = arith.addi %116, %143 : vector<1x128xi32>
    %c1_i32_42 = arith.constant 1 : i32
    %145 = vector.broadcast %c1_i32_42 : i32 to vector<1x128xi32>
    %146 = arith.addi %117, %145 : vector<1x128xi32>
    %c1_i32_43 = arith.constant 1 : i32
    %147 = vector.broadcast %c1_i32_43 : i32 to vector<1x128xi32>
    %148 = arith.muli %144, %147 : vector<1x128xi32>
    %c19349663_i32_44 = arith.constant 19349663 : i32
    %149 = vector.broadcast %c19349663_i32_44 : i32 to vector<1x128xi32>
    %150 = arith.muli %146, %149 : vector<1x128xi32>
    %151 = arith.xori %148, %150 : vector<1x128xi32>
    %c127_i32_45 = arith.constant 127 : i32
    %152 = vector.broadcast %c127_i32_45 : i32 to vector<1x128xi32>
    %153 = arith.andi %151, %152 : vector<1x128xi32>
    %cst_46 = arith.constant 1.000000e+00 : f32
    %154 = vector.broadcast %cst_46 : f32 to vector<1x128xf32>
    %155 = arith.subf %154, %114 : vector<1x128xf32>
    %156 = arith.mulf %155, %115 : vector<1x128xf32>
    %157 = vector.broadcast %107 : f32 to vector<1x128xf32>
    %158 = arith.mulf %156, %157 : vector<1x128xf32>
    %159 = vector.broadcast %153 : vector<1x128xi32> to vector<128x128xi32>
    %160 = arith.cmpi eq, %159, %118 : vector<128x128xi32>
    %cst_47 = arith.constant 0.000000e+00 : f32
    %161 = vector.shape_cast %158 : vector<1x128xf32> to vector<1x128xf32>
    %162 = vector.broadcast %161 : vector<1x128xf32> to vector<128x128xf32>
    %163 = vector.broadcast %cst_47 : f32 to vector<128x128xf32>
    %164 = arith.select %160, %162, %163 : vector<128x128xi1>, vector<128x128xf32>
    %165 = arith.addf %142, %164 : vector<128x128xf32>
    %c1_i32_48 = arith.constant 1 : i32
    %166 = vector.broadcast %c1_i32_48 : i32 to vector<1x128xi32>
    %167 = arith.addi %116, %166 : vector<1x128xi32>
    %c0_i32_49 = arith.constant 0 : i32
    %168 = vector.broadcast %c0_i32_49 : i32 to vector<1x128xi32>
    %169 = arith.addi %117, %168 : vector<1x128xi32>
    %c1_i32_50 = arith.constant 1 : i32
    %170 = vector.broadcast %c1_i32_50 : i32 to vector<1x128xi32>
    %171 = arith.muli %167, %170 : vector<1x128xi32>
    %c19349663_i32_51 = arith.constant 19349663 : i32
    %172 = vector.broadcast %c19349663_i32_51 : i32 to vector<1x128xi32>
    %173 = arith.muli %169, %172 : vector<1x128xi32>
    %174 = arith.xori %171, %173 : vector<1x128xi32>
    %c127_i32_52 = arith.constant 127 : i32
    %175 = vector.broadcast %c127_i32_52 : i32 to vector<1x128xi32>
    %176 = arith.andi %174, %175 : vector<1x128xi32>
    %cst_53 = arith.constant 1.000000e+00 : f32
    %177 = vector.broadcast %cst_53 : f32 to vector<1x128xf32>
    %178 = arith.subf %177, %115 : vector<1x128xf32>
    %179 = arith.mulf %114, %178 : vector<1x128xf32>
    %180 = vector.broadcast %107 : f32 to vector<1x128xf32>
    %181 = arith.mulf %179, %180 : vector<1x128xf32>
    %182 = vector.broadcast %176 : vector<1x128xi32> to vector<128x128xi32>
    %183 = arith.cmpi eq, %182, %118 : vector<128x128xi32>
    %cst_54 = arith.constant 0.000000e+00 : f32
    %184 = vector.shape_cast %181 : vector<1x128xf32> to vector<1x128xf32>
    %185 = vector.broadcast %184 : vector<1x128xf32> to vector<128x128xf32>
    %186 = vector.broadcast %cst_54 : f32 to vector<128x128xf32>
    %187 = arith.select %183, %185, %186 : vector<128x128xi1>, vector<128x128xf32>
    %188 = arith.addf %165, %187 : vector<128x128xf32>
    %c1_i32_55 = arith.constant 1 : i32
    %189 = vector.broadcast %c1_i32_55 : i32 to vector<1x128xi32>
    %190 = arith.addi %116, %189 : vector<1x128xi32>
    %c1_i32_56 = arith.constant 1 : i32
    %191 = vector.broadcast %c1_i32_56 : i32 to vector<1x128xi32>
    %192 = arith.addi %117, %191 : vector<1x128xi32>
    %c1_i32_57 = arith.constant 1 : i32
    %193 = vector.broadcast %c1_i32_57 : i32 to vector<1x128xi32>
    %194 = arith.muli %190, %193 : vector<1x128xi32>
    %c19349663_i32_58 = arith.constant 19349663 : i32
    %195 = vector.broadcast %c19349663_i32_58 : i32 to vector<1x128xi32>
    %196 = arith.muli %192, %195 : vector<1x128xi32>
    %197 = arith.xori %194, %196 : vector<1x128xi32>
    %c127_i32_59 = arith.constant 127 : i32
    %198 = vector.broadcast %c127_i32_59 : i32 to vector<1x128xi32>
    %199 = arith.andi %197, %198 : vector<1x128xi32>
    %200 = arith.mulf %114, %115 : vector<1x128xf32>
    %201 = vector.broadcast %107 : f32 to vector<1x128xf32>
    %202 = arith.mulf %200, %201 : vector<1x128xf32>
    %203 = vector.broadcast %199 : vector<1x128xi32> to vector<128x128xi32>
    %204 = arith.cmpi eq, %203, %118 : vector<128x128xi32>
    %cst_60 = arith.constant 0.000000e+00 : f32
    %205 = vector.shape_cast %202 : vector<1x128xf32> to vector<1x128xf32>
    %206 = vector.broadcast %205 : vector<1x128xf32> to vector<128x128xf32>
    %207 = vector.broadcast %cst_60 : f32 to vector<128x128xf32>
    %208 = arith.select %204, %206, %207 : vector<128x128xi1>, vector<128x128xf32>
    %209 = arith.addf %188, %208 : vector<128x128xf32>
    %c0_61 = arith.constant 0 : index
    %c0_62 = arith.constant 0 : index
    %210 = vector.load %arg4[%c0_61, %c0_62] : memref<8x128xf32, #tpu.memory_space<vmem>>, vector<8x128xf32>
    %cst_63 = arith.constant dense<0.000000e+00> : vector<8x128xf32>
    %211 = tpu.matmul %210, %209, %cst_63 {dimension_numbers = #tpu.dot_dimension_numbers<[1], [0], [0], [1], [0, 0, 1, 1], [], []>} : vector<8x128xf32>, vector<128x128xf32>, vector<8x128xf32> -> vector<8x128xf32>
    %212 = arith.addf %106, %211 : vector<8x128xf32>
    %c0_64 = arith.constant 0 : index
    %c0_65 = arith.constant 0 : index
    %213 = vector.load %arg5[%c0_64, %c0_65] : memref<8x128xf32, #tpu.memory_space<vmem>>, vector<8x128xf32>
    tpu.vector_store %arg5[%c0_64, %c0_65], %212 {strides = array<i32>} : memref<8x128xf32, #tpu.memory_space<vmem>>, vector<8x128xf32>,
    return
  }
  func.func @transform_0(%arg0: i32) -> i32 {
    %c0_i32 = arith.constant 0 : i32
    %c0_i32_0 = arith.constant 0 : i32
    return %c0_i32 : i32
  }
  func.func @transform_1(%arg0: i32) -> (i32, i32) {
    %c0_i32 = arith.constant 0 : i32
    %c0_i32_0 = arith.constant 0 : i32
    return %c0_i32, %arg0 : i32, i32
  }
  func.func @transform_2(%arg0: i32) -> (i32, i32) {
    %c0_i32 = arith.constant 0 : i32
    %c0_i32_0 = arith.constant 0 : i32
    %c0_i32_1 = arith.constant 0 : i32
    return %c0_i32, %c0_i32_0 : i32, i32
  }
  func.func @transform_3(%arg0: i32) -> (i32, i32) {
    %c0_i32 = arith.constant 0 : i32
    %c0_i32_0 = arith.constant 0 : i32
    %c0_i32_1 = arith.constant 0 : i32
    return %c0_i32, %c0_i32_0 : i32, i32
  }
  func.func @transform_4(%arg0: i32) -> (i32, i32) {
    %c0_i32 = arith.constant 0 : i32
    %c0_i32_0 = arith.constant 0 : i32
    return %c0_i32, %arg0 : i32, i32
  }
}

</mosaic_0001>

<llo_original>
// kernel: mrhg2d_forward.1
$region0: #{mrhg2d_forward.1}
  #allocation0 [shape = 'u32[]', space=smem, size = 0x4, offset = 0x4, fixed_abs, tag = 'smem constant byte address 0x4 - core index']
  #allocation1 [shape = 'u32[72,128]{1,0:T(1,128)}', space=vmem, size = 0x9000, scoped, tag = 'internal scratch']
  %s0 = inlined_call_operand.vmem [shape: f32[2], index: 0, kind: input, shape index: {}]
  %s1 = inlined_call_operand.vmem [shape: f32[2,1024], index: 1, kind: input, shape index: {}]
  %s2 = inlined_call_operand.vmem [shape: f32[8,256], index: 2, kind: input, shape index: {}]
  %s3 = inlined_call_operand.vmem [shape: f32[8,128], index: 3, kind: input, shape index: {}]
  %s4 = inlined_call_operand.vmem [shape: f32[8,1024], index: 4, kind: output, shape index: {}]
  %s5 = sld [smem:[#allocation0]]
  $region53: #{mrhg2d_forward.1} parent=0
    _
  %s7 = ssub.s32 1, %s5
  %s8 = scalar_select 0, %s7, %s5
  $region1: #{mrhg2d_forward.1} parent=0
    #allocation2 [shape = 'u8[512]{0}', space=smem, size = 0x200, scoped, tag = 'input window, operand 0, single buffered']
    #allocation3 [shape = 's32[2]{0}', space=sflag, size = 0x8, scoped, tag = 'scoped memory for mrhg2d_forward.1']
    %9 = vsyncpa [#allocation3], 0
    loop: start=0, step=1, limit=10
    $region2: #{mrhg2d_forward.1} parent=1 // loop_pre_header
      _
    $region3: #{mrhg2d_forward.1} parent=1 // loop_header
      %s11 = sphi 0, %s15
      %p12 = scmp.ge.s32.totalorder %s11, 10
      %s19 = sphi 0, %s19
      %s21 = sphi 0, %s19
      %s22 = sphi 0, %s21
      %s36 = sphi 0, %s22
      %s42 = sphi 0, %s44
      %s45 = sphi 0, %s42
      %s46 = sphi 0, %s45
      %s62 = sphi 0, %s46
      %s66 = sphi 0, %s66
      %s68 = sphi 0, %s66
      %s69 = sphi 0, %s68
      %s83 = sphi 0, %s69
      %s87 = sphi 0, %s87
      %s89 = sphi 0, %s87
      %s90 = sphi 0, %s89
      %s104 = sphi 0, %s90
      %s110 = sphi 0, %s112
      %s113 = sphi 0, %s110
      %s114 = sphi 0, %s113
      %s130 = sphi 0, %s114
    $region4: #{mrhg2d_forward.1} parent=1 // loop_header_branch
      %14 = sbr.rel (%p12) target = $region8
    $region5: #{mrhg2d_forward.1} parent=1 // loop_body
      %s16 = ssub.s32 %s11, 1
      %s17 = ssub.s32 %s11, 2
      %s18 = sadd.s32 %s11, 1
      %s20 = sadd.s32 %s19, 1
      %p23 = scmp.eq.s32.totalorder %s11, 7
      %p24 = scmp.ne.s32.totalorder %s19, %s21
      %p25 = scmp.eq.s32.totalorder %s11, 0
      %p26 = por %p24, %p25
      %p27 = scmp.ne.s32.totalorder %s19, %s21
      %p28 = scmp.eq.s32.totalorder %s16, 7
      %p29 = por %p27, %p28
      %p30 = scmp.ne.s32.totalorder %s21, %s22
      %p31 = scmp.eq.s32.totalorder %s16, 0
      %p32 = por %p30, %p31
      %p33 = scmp.ne.s32.totalorder %s21, %s22
      %p34 = scmp.eq.s32.totalorder %s17, 7
      %p35 = por %p33, %p34
      %p37 = scmp.ne.s32.totalorder %s22, %s36
      %p38 = scmp.eq.s32.totalorder %s17, 0
      %p39 = por %p37, %p38
      %s40 = ssub.s32 %s11, %s18
      %p41 = scmp.eq.s32.totalorder %s40, 0
      %s43 = sadd.s32 %s42, 1
      %s44 = scalar_select %p41, %s42, %s43
      %p47 = pneg %p41
      %p48 = scmp.eq.s32.totalorder %s11, 7
      %p49 = por %p47, %p48
      %p50 = scmp.ne.s32.totalorder %s42, %s45
      %p51 = scmp.eq.s32.totalorder %s11, 0
      %p52 = por %p50, %p51
      %p53 = scmp.ne.s32.totalorder %s42, %s45
      %p54 = scmp.eq.s32.totalorder %s16, 7
      %p55 = por %p53, %p54
      %p56 = scmp.ne.s32.totalorder %s45, %s46
      %p57 = scmp.eq.s32.totalorder %s16, 0
      %p58 = por %p56, %p57
      %p59 = scmp.ne.s32.totalorder %s45, %s46
      %p60 = scmp.eq.s32.totalorder %s17, 7
      %p61 = por %p59, %p60
      %p63 = scmp.ne.s32.totalorder %s46, %s62
      %p64 = scmp.eq.s32.totalorder %s17, 0
      %p65 = por %p63, %p64
      %s67 = sadd.s32 %s66, 1
      %p70 = scmp.eq.s32.totalorder %s11, 7
      %p71 = scmp.ne.s32.totalorder %s66, %s68
      %p72 = scmp.eq.s32.totalorder %s11, 0
      %p73 = por %p71, %p72
      %p74 = scmp.ne.s32.totalorder %s66, %s68
      %p75 = scmp.eq.s32.totalorder %s16, 7
      %p76 = por %p74, %p75
      %p77 = scmp.ne.s32.totalorder %s68, %s69
      %p78 = scmp.eq.s32.totalorder %s16, 0
      %p79 = por %p77, %p78
      %p80 = scmp.ne.s32.totalorder %s68, %s69
      %p81 = scmp.eq.s32.totalorder %s17, 7
      %p82 = por %p80, %p81
      %p84 = scmp.ne.s32.totalorder %s69, %s83
      %p85 = scmp.eq.s32.totalorder %s17, 0
      %p86 = por %p84, %p85
      %s88 = sadd.s32 %s87, 1
      %p91 = scmp.eq.s32.totalorder %s11, 7
      %p92 = scmp.ne.s32.totalorder %s87, %s89
      %p93 = scmp.eq.s32.totalorder %s11, 0
      %p94 = por %p92, %p93
      %p95 = scmp.ne.s32.totalorder %s87, %s89
      %p96 = scmp.eq.s32.totalorder %s16, 7
      %p97 = por %p95, %p96
      %p98 = scmp.ne.s32.totalorder %s89, %s90
      %p99 = scmp.eq.s32.totalorder %s16, 0
      %p100 = por %p98, %p99
      %p101 = scmp.ne.s32.totalorder %s89, %s90
      %p102 = scmp.eq.s32.totalorder %s17, 7
      %p103 = por %p101, %p102
      %p105 = scmp.ne.s32.totalorder %s90, %s104
      %p106 = scmp.eq.s32.totalorder %s17, 0
      %p107 = por %p105, %p106
      %s108 = ssub.s32 %s11, %s18
      %p109 = scmp.eq.s32.totalorder %s108, 0
      %s111 = sadd.s32 %s110, 1
      %s112 = scalar_select %p109, %s110, %s111
      %p115 = pneg %p109
      %p116 = scmp.eq.s32.totalorder %s11, 7
      %p117 = por %p115, %p116
      %p118 = scmp.ne.s32.totalorder %s110, %s113
      %p119 = scmp.eq.s32.totalorder %s11, 0
      %p120 = por %p118, %p119
      %p121 = scmp.ne.s32.totalorder %s110, %s113
      %p122 = scmp.eq.s32.totalorder %s16, 7
      %p123 = por %p121, %p122
      %p124 = scmp.ne.s32.totalorder %s113, %s114
      %p125 = scmp.eq.s32.totalorder %s16, 0
      %p126 = por %p124, %p125
      %p127 = scmp.ne.s32.totalorder %s113, %s114
      %p128 = scmp.eq.s32.totalorder %s17, 7
      %p129 = por %p127, %p128
      %p131 = scmp.ne.s32.totalorder %s114, %s130
      %p132 = scmp.eq.s32.totalorder %s17, 0
      %p133 = por %p131, %p132
      %p134 = scmp.le.s32.totalorder 1, %s11
      %p135 = scmp.lt.s32.totalorder %s11, 9
      %p136 = pnand %p134, %p135
      %p137 = pneg %p136
      // Predicated region
      $region9: #{mrhg2d_forward.1} parent=5 // pred_check
        _
      $region10: #{mrhg2d_forward.1} parent=5 // pred_check_branch
        %139 = sbr.rel (%p136) target = $region12
      $region11: #{mrhg2d_forward.1} parent=5 // pred_region
        %s140 = ssub.s32 %s11, 1
        // Predicated region
        $region13: #{mrhg2d_forward.1} parent=11 // pred_check
          %p141 = pneg %p32
        $region14: #{mrhg2d_forward.1} parent=11 // pred_check_branch
          %143 = sbr.rel (%p141) target = $region16
        $region15: #{mrhg2d_forward.1} parent=11 // pred_region
          %145 = vsyncadd [#allocation3], 0
          %s147 = sshll.u32 %s0, 4
          %s148 = int_to_ptr.vmem [resolvable:$true] %s147
          %150 = dma.vmem_to_smem %s148, 16, [#allocation2], [#allocation3]
        $region16: #{mrhg2d_forward.1} parent=11 // pred_fallthru
          _
        // Predicated region
        $region17: #{mrhg2d_forward.1} parent=11 // pred_check
          %p151 = pneg %p79
        $region18: #{mrhg2d_forward.1} parent=11 // pred_check_branch
          %153 = sbr.rel (%p151) target = $region20
        $region19: #{mrhg2d_forward.1} parent=11 // pred_region
          _
        $region20: #{mrhg2d_forward.1} parent=11 // pred_fallthru
          _
        // Predicated region
        $region21: #{mrhg2d_forward.1} parent=11 // pred_check
          %p154 = pneg %p100
        $region22: #{mrhg2d_forward.1} parent=11 // pred_check_branch
          %156 = sbr.rel (%p154) target = $region24
        $region23: #{mrhg2d_forward.1} parent=11 // pred_region
          _
        $region24: #{mrhg2d_forward.1} parent=11 // pred_fallthru
          _
      $region12: #{mrhg2d_forward.1} parent=5 // pred_fallthru
        _
      %p157 = scmp.lt.s32.totalorder %s11, 8
      // Predicated region
      $region25: #{mrhg2d_forward.1} parent=5 // pred_check
        %p158 = pneg %p157
      $region26: #{mrhg2d_forward.1} parent=5 // pred_check_branch
        %160 = sbr.rel (%p158) target = $region28
      $region27: #{mrhg2d_forward.1} parent=5 // pred_region
        // Predicated region
        $region29: #{mrhg2d_forward.1} parent=27 // pred_check
          %p161 = pneg %p52
        $region30: #{mrhg2d_forward.1} parent=27 // pred_check_branch
          %163 = sbr.rel (%p161) target = $region32
        $region31: #{mrhg2d_forward.1} parent=27 // pred_region
          %p164 = scmp.lt.s32.totalorder %s11, 7
          %s165 = scalar_select %p164, %s11, 7
          %s166 = smul.addr %s165, 2
          %s167 = scalar_lea.vmem %s1, %s166
        $region32: #{mrhg2d_forward.1} parent=27 // pred_fallthru
          _
      $region28: #{mrhg2d_forward.1} parent=5 // pred_fallthru
        _
      %p168 = scmp.le.s32.totalorder 1, %s11
      %p169 = scmp.lt.s32.totalorder %s11, 9
      %p170 = pnand %p168, %p169
      %p171 = pneg %p170
      // Predicated region
      $region33: #{mrhg2d_forward.1} parent=5 // pred_check
        _
      $region34: #{mrhg2d_forward.1} parent=5 // pred_check_branch
        %173 = sbr.rel (%p170) target = $region36
      $region35: #{mrhg2d_forward.1} parent=5 // pred_region
        %s174 = ssub.s32 %s11, 1
        // Predicated region
        $region37: #{mrhg2d_forward.1} parent=35 // pred_check
          %p175 = pneg %p32
        $region38: #{mrhg2d_forward.1} parent=35 // pred_check_branch
          %177 = sbr.rel (%p175) target = $region40
        $region39: #{mrhg2d_forward.1} parent=35 // pred_region
          %179 = dma.done [#allocation3], 16
        $region40: #{mrhg2d_forward.1} parent=35 // pred_fallthru
          _
        %180 = sfence
        %p181 = pneg %p32
        %p182 = pneg %p29
        %p183 = scmp.lt.s32.totalorder %s16, 7
        %s184 = scalar_select %p183, %s16, 7
        %s185 = smul.addr %s184, 2
        %s186 = scalar_lea.vmem %s1, %s185
        %p187 = pneg %p58
        %p188 = pneg %p55
        %p189 = pneg %p79
        %p190 = pneg %p76
        %p191 = pneg %p100
        %p192 = pneg %p97
        %p193 = pneg %p126
        %p194 = pneg %p123
        %p195 = scmp.lt.s32.totalorder %s16, 7
        %s196 = scalar_select %p195, %s16, 7
        %s197 = smul.addr %s196, 8
        %s198 = scalar_lea.vmem %s4, %s197
        %p199 = scmp.lt.s32.totalorder %s16, 7
        %s200 = scalar_select %p199, %s16, 7
        %s201 = smul.addr %s200, 2
        %s202 = scalar_lea.vmem %s1, %s201
        %p203 = scmp.lt.s32.totalorder %s16, 7
        %s204 = scalar_select %p203, %s16, 7
        %s205 = smul.addr %s204, 8
        %s206 = scalar_lea.vmem %s4, %s205
        %v207 = vld [vmem:[%s202] sm:$0x1]
        %v208 = vld [vmem:[%s202 + $0x1] sm:$0x1]
        %s209 = sld [smem:[#allocation2]]
        %v210 = vrcp.pop 16.0
        %v211 = vmul.f32 16.0, %v210
        %v212 = vsub.f32 1.0, %v211
        %v213 = vmul.f32 %v210, %v212
        %v214 = vadd.f32 %v210, %v213
        %vm215 = vweird.f32 %v210
        %v216 = vsel %vm215, %v210, %v214
        %v217 = vmul.f32 %v207, %v216
        %v218 = vmul.f32 %v208, %v216
        %v219 = vfloor.f32 %v217
        %v220 = vfloor.f32 %v218
        %v221 = vsub.f32 %v217, %v219
        %v222 = vsub.f32 %v218, %v220
        %v223 = vcvt.f32.s32.to.zero.pseudo %v219
        %v224 = vcvt.f32.s32.to.zero.pseudo %v220
        %v225 = vlaneseq
        %v226 = vshrl.u32 %v225, 7
        %v227 = vadd.s32 %v226, 8
        %v228 = vadd.s32 %v226, 16
        %v229 = vadd.s32 %v226, 24
        %v230 = vadd.s32 %v226, 32
        %v231 = vadd.s32 %v226, 40
        %v232 = vadd.s32 %v226, 48
        %v233 = vadd.s32 %v226, 56
        %v234 = vadd.s32 %v226, 64
        %v235 = vadd.s32 %v226, 72
        %v236 = vadd.s32 %v226, 80
        %v237 = vadd.s32 %v226, 88
        %v238 = vadd.s32 %v226, 96
        %v239 = vadd.s32 %v226, 104
        %v240 = vadd.s32 %v226, 112
        %v241 = vadd.s32 %v226, 120
        %v242 = vadd.s32 %v226, 128
        %v243 = vadd.s32 %v226, 136
        %v244 = vadd.s32 %v226, 144
        %v245 = vadd.s32 %v226, 152
        %v246 = vadd.s32 %v226, 160
        %v247 = vadd.s32 %v226, 168
        %v248 = vadd.s32 %v226, 176
        %v249 = vadd.s32 %v226, 184
        %v250 = vadd.s32 %v226, 192
        %v251 = vadd.s32 %v226, 200
        %v252 = vadd.s32 %v226, 208
        %v253 = vadd.s32 %v226, 216
        %v254 = vadd.s32 %v226, 224
        %v255 = vadd.s32 %v226, 232
        %v256 = vadd.s32 %v226, 240
        %v257 = vadd.s32 %v226, 248
        %v258 = vmul.u32 %v224, 19349663
        %v259 = vxor.u32 %v223, %v258
        %v260 = vand.u32 %v259, 255
        %v261 = vsub.f32 1.0, %v221
        %v262 = vsub.f32 1.0, %v222
        %v263 = vmul.f32 %v261, %v262
        %v264 = vstv %s209
        %v265 = vmul.f32 %v263, %v264
        %v266 = vperm.slane %v260, 0
        %vm267 = vcmp.eq.s32.totalorder %v266, %v226
        %vm268 = vcmp.eq.s32.totalorder %v266, %v227
        %vm269 = vcmp.eq.s32.totalorder %v266, %v228
        %vm270 = vcmp.eq.s32.totalorder %v266, %v229
        %vm271 = vcmp.eq.s32.totalorder %v266, %v230
        %vm272 = vcmp.eq.s32.totalorder %v266, %v231
        %vm273 = vcmp.eq.s32.totalorder %v266, %v232
        %vm274 = vcmp.eq.s32.totalorder %v266, %v233
        %vm275 = vcmp.eq.s32.totalorder %v266, %v234
        %vm276 = vcmp.eq.s32.totalorder %v266, %v235
        %vm277 = vcmp.eq.s32.totalorder %v266, %v236
        %vm278 = vcmp.eq.s32.totalorder %v266, %v237
        %vm279 = vcmp.eq.s32.totalorder %v266, %v238
        %vm280 = vcmp.eq.s32.totalorder %v266, %v239
        %vm281 = vcmp.eq.s32.totalorder %v266, %v240
        %vm282 = vcmp.eq.s32.totalorder %v266, %v241
        %vm283 = vcmp.eq.s32.totalorder %v266, %v242
        %vm284 = vcmp.eq.s32.totalorder %v266, %v243
        %vm285 = vcmp.eq.s32.totalorder %v266, %v244
        %vm286 = vcmp.eq.s32.totalorder %v266, %v245
        %vm287 = vcmp.eq.s32.totalorder %v266, %v246
        %vm288 = vcmp.eq.s32.totalorder %v266, %v247
        %vm289 = vcmp.eq.s32.totalorder %v266, %v248
        %vm290 = vcmp.eq.s32.totalorder %v266, %v249
        %vm291 = vcmp.eq.s32.totalorder %v266, %v250
        %vm292 = vcmp.eq.s32.totalorder %v266, %v251
        %vm293 = vcmp.eq.s32.totalorder %v266, %v252
        %vm294 = vcmp.eq.s32.totalorder %v266, %v253
        %vm295 = vcmp.eq.s32.totalorder %v266, %v254
        %vm296 = vcmp.eq.s32.totalorder %v266, %v255
        %vm297 = vcmp.eq.s32.totalorder %v266, %v256
        %vm298 = vcmp.eq.s32.totalorder %v266, %v257
        %v299 = vperm.slane %v265, 0
        %v300 = vsel %vm267, %v299, 0.0
        %v301 = vsel %vm268, %v299, 0.0
        %v302 = vsel %vm269, %v299, 0.0
        %v303 = vsel %vm270, %v299, 0.0
        %v304 = vsel %vm271, %v299, 0.0
        %v305 = vsel %vm272, %v299, 0.0
        %v306 = vsel %vm273, %v299, 0.0
        %v307 = vsel %vm274, %v299, 0.0
        %v308 = vsel %vm275, %v299, 0.0
        %v309 = vsel %vm276, %v299, 0.0
        %v310 = vsel %vm277, %v299, 0.0
        %v311 = vsel %vm278, %v299, 0.0
        %v312 = vsel %vm279, %v299, 0.0
        %v313 = vsel %vm280, %v299, 0.0
        %v314 = vsel %vm281, %v299, 0.0
        %v315 = vsel %vm282, %v299, 0.0
        %v316 = vsel %vm283, %v299, 0.0
        %v317 = vsel %vm284, %v299, 0.0
        %v318 = vsel %vm285, %v299, 0.0
        %v319 = vsel %vm286, %v299, 0.0
        %v320 = vsel %vm287, %v299, 0.0
        %v321 = vsel %vm288, %v299, 0.0
        %v322 = vsel %vm289, %v299, 0.0
        %v323 = vsel %vm290, %v299, 0.0
        %v324 = vsel %vm291, %v299, 0.0
        %v325 = vsel %vm292, %v299, 0.0
        %v326 = vsel %vm293, %v299, 0.0
        %v327 = vsel %vm294, %v299, 0.0
        %v328 = vsel %vm295, %v299, 0.0
        %v329 = vsel %vm296, %v299, 0.0
        %v330 = vsel %vm297, %v299, 0.0
        %v331 = vsel %vm298, %v299, 0.0
        %v332 = vadd.s32 %v224, 1
        %v333 = vmul.u32 %v332, 19349663
        %v334 = vxor.u32 %v223, %v333
        %v335 = vand.u32 %v334, 255
        %v336 = vmul.f32 %v261, %v222
        %v337 = vmul.f32 %v336, %v264
        %v338 = vperm.slane %v335, 0
        %vm339 = vcmp.eq.s32.totalorder %v338, %v226
        %vm340 = vcmp.eq.s32.totalorder %v338, %v227
        %vm341 = vcmp.eq.s32.totalorder %v338, %v228
        %vm342 = vcmp.eq.s32.totalorder %v338, %v229
        %vm343 = vcmp.eq.s32.totalorder %v338, %v230
        %vm344 = vcmp.eq.s32.totalorder %v338, %v231
        %vm345 = vcmp.eq.s32.totalorder %v338, %v232
        %vm346 = vcmp.eq.s32.totalorder %v338, %v233
        %vm347 = vcmp.eq.s32.totalorder %v338, %v234
        %vm348 = vcmp.eq.s32.totalorder %v338, %v235
        %vm349 = vcmp.eq.s32.totalorder %v338, %v236
        %vm350 = vcmp.eq.s32.totalorder %v338, %v237
        %vm351 = vcmp.eq.s32.totalorder %v338, %v238
        %vm352 = vcmp.eq.s32.totalorder %v338, %v239
        %vm353 = vcmp.eq.s32.totalorder %v338, %v240
        %vm354 = vcmp.eq.s32.totalorder %v338, %v241
        %vm355 = vcmp.eq.s32.totalorder %v338, %v242
        %vm356 = vcmp.eq.s32.totalorder %v338, %v243
        %vm357 = vcmp.eq.s32.totalorder %v338, %v244
        %vm358 = vcmp.eq.s32.totalorder %v338, %v245
        %vm359 = vcmp.eq.s32.totalorder %v338, %v246
        %vm360 = vcmp.eq.s32.totalorder %v338, %v247
        %vm361 = vcmp.eq.s32.totalorder %v338, %v248
        %vm362 = vcmp.eq.s32.totalorder %v338, %v249
        %vm363 = vcmp.eq.s32.totalorder %v338, %v250
        %vm364 = vcmp.eq.s32.totalorder %v338, %v251
        %vm365 = vcmp.eq.s32.totalorder %v338, %v252
        %vm366 = vcmp.eq.s32.totalorder %v338, %v253
        %vm367 = vcmp.eq.s32.totalorder %v338, %v254
        %vm368 = vcmp.eq.s32.totalorder %v338, %v255
        %vm369 = vcmp.eq.s32.totalorder %v338, %v256
        %vm370 = vcmp.eq.s32.totalorder %v338, %v257
        %v371 = vperm.slane %v337, 0
        %v372 = vsel %vm339, %v371, 0.0
        %v373 = vsel %vm340, %v371, 0.0
        %v374 = vsel %vm341, %v371, 0.0
        %v375 = vsel %vm342, %v371, 0.0
        %v376 = vsel %vm343, %v371, 0.0
        %v377 = vsel %vm344, %v371, 0.0
        %v378 = vsel %vm345, %v371, 0.0
        %v379 = vsel %vm346, %v371, 0.0
        %v380 = vsel %vm347, %v371, 0.0
        %v381 = vsel %vm348, %v371, 0.0
        %v382 = vsel %vm349, %v371, 0.0
        %v383 = vsel %vm350, %v371, 0.0
        %v384 = vsel %vm351, %v371, 0.0
        %v385 = vsel %vm352, %v371, 0.0
        %v386 = vsel %vm353, %v371, 0.0
        %v387 = vsel %vm354, %v371, 0.0
        %v388 = vsel %vm355, %v371, 0.0
        %v389 = vsel %vm356, %v371, 0.0
        %v390 = vsel %vm357, %v371, 0.0
        %v391 = vsel %vm358, %v371, 0.0
        %v392 = vsel %vm359, %v371, 0.0
        %v393 = vsel %vm360, %v371, 0.0
        %v394 = vsel %vm361, %v371, 0.0
        %v395 = vsel %vm362, %v371, 0.0
        %v396 = vsel %vm363, %v371, 0.0
        %v397 = vsel %vm364, %v371, 0.0
        %v398 = vsel %vm365, %v371, 0.0
        %v399 = vsel %vm366, %v371, 0.0
        %v400 = vsel %vm367, %v371, 0.0
        %v401 = vsel %vm368, %v371, 0.0
        %v402 = vsel %vm369, %v371, 0.0
        %v403 = vsel %vm370, %v371, 0.0
        %v404 = vadd.f32 %v300, %v372
        %v405 = vadd.f32 %v301, %v373
        %v406 = vadd.f32 %v302, %v374
        %v407 = vadd.f32 %v303, %v375
        %v408 = vadd.f32 %v304, %v376
        %v409 = vadd.f32 %v305, %v377
        %v410 = vadd.f32 %v306, %v378
        %v411 = vadd.f32 %v307, %v379
        %v412 = vadd.f32 %v308, %v380
        %v413 = vadd.f32 %v309, %v381
        %v414 = vadd.f32 %v310, %v382
        %v415 = vadd.f32 %v311, %v383
        %v416 = vadd.f32 %v312, %v384
        %v417 = vadd.f32 %v313, %v385
        %v418 = vadd.f32 %v314, %v386
        %v419 = vadd.f32 %v315, %v387
        %v420 = vadd.f32 %v316, %v388
        %v421 = vadd.f32 %v317, %v389
        %v422 = vadd.f32 %v318, %v390
        %v423 = vadd.f32 %v319, %v391
        %v424 = vadd.f32 %v320, %v392
        %v425 = vadd.f32 %v321, %v393
        %v426 = vadd.f32 %v322, %v394
        %v427 = vadd.f32 %v323, %v395
        %v428 = vadd.f32 %v324, %v396
        %v429 = vadd.f32 %v325, %v397
        %v430 = vadd.f32 %v326, %v398
        %v431 = vadd.f32 %v327, %v399
        %v432 = vadd.f32 %v328, %v400
        %v433 = vadd.f32 %v329, %v401
        %v434 = vadd.f32 %v330, %v402
        %v435 = vadd.f32 %v331, %v403
        %v436 = vadd.s32 %v223, 1
        %v437 = vxor.u32 %v436, %v258
        %v438 = vand.u32 %v437, 255
        %v439 = vmul.f32 %v221, %v262
        %v440 = vmul.f32 %v439, %v264
        %v441 = vperm.slane %v438, 0
        %vm442 = vcmp.eq.s32.totalorder %v441, %v226
        %vm443 = vcmp.eq.s32.totalorder %v441, %v227
        %vm444 = vcmp.eq.s32.totalorder %v441, %v228
        %vm445 = vcmp.eq.s32.totalorder %v441, %v229
        %vm446 = vcmp.eq.s32.totalorder %v441, %v230
        %vm447 = vcmp.eq.s32.totalorder %v441, %v231
        %vm448 = vcmp.eq.s32.totalorder %v441, %v232
        %vm449 = vcmp.eq.s32.totalorder %v441, %v233
        %vm450 = vcmp.eq.s32.totalorder %v441, %v234
        %vm451 = vcmp.eq.s32.totalorder %v441, %v235
        %vm452 = vcmp.eq.s32.totalorder %v441, %v236
        %vm453 = vcmp.eq.s32.totalorder %v441, %v237
        %vm454 = vcmp.eq.s32.totalorder %v441, %v238
        %vm455 = vcmp.eq.s32.totalorder %v441, %v239
        %vm456 = vcmp.eq.s32.totalorder %v441, %v240
        %vm457 = vcmp.eq.s32.totalorder %v441, %v241
        %vm458 = vcmp.eq.s32.totalorder %v441, %v242
        %vm459 = vcmp.eq.s32.totalorder %v441, %v243
        %vm460 = vcmp.eq.s32.totalorder %v441, %v244
        %vm461 = vcmp.eq.s32.totalorder %v441, %v245
        %vm462 = vcmp.eq.s32.totalorder %v441, %v246
        %vm463 = vcmp.eq.s32.totalorder %v441, %v247
        %vm464 = vcmp.eq.s32.totalorder %v441, %v248
        %vm465 = vcmp.eq.s32.totalorder %v441, %v249
        %vm466 = vcmp.eq.s32.totalorder %v441, %v250
        %vm467 = vcmp.eq.s32.totalorder %v441, %v251
        %vm468 = vcmp.eq.s32.totalorder %v441, %v252
        %vm469 = vcmp.eq.s32.totalorder %v441, %v253
        %vm470 = vcmp.eq.s32.totalorder %v441, %v254
        %vm471 = vcmp.eq.s32.totalorder %v441, %v255
        %vm472 = vcmp.eq.s32.totalorder %v441, %v256
        %vm473 = vcmp.eq.s32.totalorder %v441, %v257
        %v474 = vperm.slane %v440, 0
        %v475 = vsel %vm442, %v474, 0.0
        %v476 = vsel %vm443, %v474, 0.0
        %v477 = vsel %vm444, %v474, 0.0
        %v478 = vsel %vm445, %v474, 0.0
        %v479 = vsel %vm446, %v474, 0.0
        %v480 = vsel %vm447, %v474, 0.0
        %v481 = vsel %vm448, %v474, 0.0
        %v482 = vsel %vm449, %v474, 0.0
        %v483 = vsel %vm450, %v474, 0.0
        %v484 = vsel %vm451, %v474, 0.0
        %v485 = vsel %vm452, %v474, 0.0
        %v486 = vsel %vm453, %v474, 0.0
        %v487 = vsel %vm454, %v474, 0.0
        %v488 = vsel %vm455, %v474, 0.0
        %v489 = vsel %vm456, %v474, 0.0
        %v490 = vsel %vm457, %v474, 0.0
        %v491 = vsel %vm458, %v474, 0.0
        %v492 = vsel %vm459, %v474, 0.0
        %v493 = vsel %vm460, %v474, 0.0
        %v494 = vsel %vm461, %v474, 0.0
        %v495 = vsel %vm462, %v474, 0.0
        %v496 = vsel %vm463, %v474, 0.0
        %v497 = vsel %vm464, %v474, 0.0
        %v498 = vsel %vm465, %v474, 0.0
        %v499 = vsel %vm466, %v474, 0.0
        %v500 = vsel %vm467, %v474, 0.0
        %v501 = vsel %vm468, %v474, 0.0
        %v502 = vsel %vm469, %v474, 0.0
        %v503 = vsel %vm470, %v474, 0.0
        %v504 = vsel %vm471, %v474, 0.0
        %v505 = vsel %vm472, %v474, 0.0
        %v506 = vsel %vm473, %v474, 0.0
        %v507 = vadd.f32 %v404, %v475
        %v508 = vadd.f32 %v405, %v476
        %v509 = vadd.f32 %v406, %v477
        %v510 = vadd.f32 %v407, %v478
        %v511 = vadd.f32 %v408, %v479
        %v512 = vadd.f32 %v409, %v480
        %v513 = vadd.f32 %v410, %v481
        %v514 = vadd.f32 %v411, %v482
        %v515 = vadd.f32 %v412, %v483
        %v516 = vadd.f32 %v413, %v484
        %v517 = vadd.f32 %v414, %v485
        %v518 = vadd.f32 %v415, %v486
        %v519 = vadd.f32 %v416, %v487
        %v520 = vadd.f32 %v417, %v488
        %v521 = vadd.f32 %v418, %v489
        %v522 = vadd.f32 %v419, %v490
        %v523 = vadd.f32 %v420, %v491
        %v524 = vadd.f32 %v421, %v492
        %v525 = vadd.f32 %v422, %v493
        %v526 = vadd.f32 %v423, %v494
        %v527 = vadd.f32 %v424, %v495
        %v528 = vadd.f32 %v425, %v496
        %v529 = vadd.f32 %v426, %v497
        %v530 = vadd.f32 %v427, %v498
        %v531 = vadd.f32 %v428, %v499
        %v532 = vadd.f32 %v429, %v500
        %v533 = vadd.f32 %v430, %v501
        %v534 = vadd.f32 %v431, %v502
        %v535 = vadd.f32 %v432, %v503
        %v536 = vadd.f32 %v433, %v504
        %v537 = vadd.f32 %v434, %v505
        %v538 = vadd.f32 %v435, %v506
        %v539 = vxor.u32 %v436, %v333
        %v540 = vand.u32 %v539, 255
        %v541 = vmul.f32 %v221, %v222
        %v542 = vmul.f32 %v541, %v264
        %v543 = vperm.slane %v540, 0
        %vm544 = vcmp.eq.s32.totalorder %v543, %v226
        %vm545 = vcmp.eq.s32.totalorder %v543, %v227
        %vm546 = vcmp.eq.s32.totalorder %v543, %v228
        %vm547 = vcmp.eq.s32.totalorder %v543, %v229
        %vm548 = vcmp.eq.s32.totalorder %v543, %v230
        %vm549 = vcmp.eq.s32.totalorder %v543, %v231
        %vm550 = vcmp.eq.s32.totalorder %v543, %v232
        %vm551 = vcmp.eq.s32.totalorder %v543, %v233
        %vm552 = vcmp.eq.s32.totalorder %v543, %v234
        %vm553 = vcmp.eq.s32.totalorder %v543, %v235
        %vm554 = vcmp.eq.s32.totalorder %v543, %v236
        %vm555 = vcmp.eq.s32.totalorder %v543, %v237
        %vm556 = vcmp.eq.s32.totalorder %v543, %v238
        %vm557 = vcmp.eq.s32.totalorder %v543, %v239
        %vm558 = vcmp.eq.s32.totalorder %v543, %v240
        %vm559 = vcmp.eq.s32.totalorder %v543, %v241
        %vm560 = vcmp.eq.s32.totalorder %v543, %v242
        %vm561 = vcmp.eq.s32.totalorder %v543, %v243
        %vm562 = vcmp.eq.s32.totalorder %v543, %v244
        %vm563 = vcmp.eq.s32.totalorder %v543, %v245
        %vm564 = vcmp.eq.s32.totalorder %v543, %v246
        %vm565 = vcmp.eq.s32.totalorder %v543, %v247
        %vm566 = vcmp.eq.s32.totalorder %v543, %v248
        %vm567 = vcmp.eq.s32.totalorder %v543, %v249
        %vm568 = vcmp.eq.s32.totalorder %v543, %v250
        %vm569 = vcmp.eq.s32.totalorder %v543, %v251
        %vm570 = vcmp.eq.s32.totalorder %v543, %v252
        %vm571 = vcmp.eq.s32.totalorder %v543, %v253
        %vm572 = vcmp.eq.s32.totalorder %v543, %v254
        %vm573 = vcmp.eq.s32.totalorder %v543, %v255
        %vm574 = vcmp.eq.s32.totalorder %v543, %v256
        %vm575 = vcmp.eq.s32.totalorder %v543, %v257
        %v576 = vperm.slane %v542, 0
        %v577 = vsel %vm544, %v576, 0.0
        %v578 = vsel %vm545, %v576, 0.0
        %v579 = vsel %vm546, %v576, 0.0
        %v580 = vsel %vm547, %v576, 0.0
        %v581 = vsel %vm548, %v576, 0.0
        %v582 = vsel %vm549, %v576, 0.0
        %v583 = vsel %vm550, %v576, 0.0
        %v584 = vsel %vm551, %v576, 0.0
        %v585 = vsel %vm552, %v576, 0.0
        %v586 = vsel %vm553, %v576, 0.0
        %v587 = vsel %vm554, %v576, 0.0
        %v588 = vsel %vm555, %v576, 0.0
        %v589 = vsel %vm556, %v576, 0.0
        %v590 = vsel %vm557, %v576, 0.0
        %v591 = vsel %vm558, %v576, 0.0
        %v592 = vsel %vm559, %v576, 0.0
        %v593 = vsel %vm560, %v576, 0.0
        %v594 = vsel %vm561, %v576, 0.0
        %v595 = vsel %vm562, %v576, 0.0
        %v596 = vsel %vm563, %v576, 0.0
        %v597 = vsel %vm564, %v576, 0.0
        %v598 = vsel %vm565, %v576, 0.0
        %v599 = vsel %vm566, %v576, 0.0
        %v600 = vsel %vm567, %v576, 0.0
        %v601 = vsel %vm568, %v576, 0.0
        %v602 = vsel %vm569, %v576, 0.0
        %v603 = vsel %vm570, %v576, 0.0
        %v604 = vsel %vm571, %v576, 0.0
        %v605 = vsel %vm572, %v576, 0.0
        %v606 = vsel %vm573, %v576, 0.0
        %v607 = vsel %vm574, %v576, 0.0
        %v608 = vsel %vm575, %v576, 0.0
        %v609 = vadd.f32 %v507, %v577
        %v610 = vadd.f32 %v508, %v578
        %v611 = vadd.f32 %v509, %v579
        %v612 = vadd.f32 %v510, %v580
        %v613 = vadd.f32 %v511, %v581
        %v614 = vadd.f32 %v512, %v582
        %v615 = vadd.f32 %v513, %v583
        %v616 = vadd.f32 %v514, %v584
        %v617 = vadd.f32 %v515, %v585
        %v618 = vadd.f32 %v516, %v586
        %v619 = vadd.f32 %v517, %v587
        %v620 = vadd.f32 %v518, %v588
        %v621 = vadd.f32 %v519, %v589
        %v622 = vadd.f32 %v520, %v590
        %v623 = vadd.f32 %v521, %v591
        %v624 = vadd.f32 %v522, %v592
        %v625 = vadd.f32 %v523, %v593
        %v626 = vadd.f32 %v524, %v594
        %v627 = vadd.f32 %v525, %v595
        %v628 = vadd.f32 %v526, %v596
        %v629 = vadd.f32 %v527, %v597
        %v630 = vadd.f32 %v528, %v598
        %v631 = vadd.f32 %v529, %v599
        %v632 = vadd.f32 %v530, %v600
        %v633 = vadd.f32 %v531, %v601
        %v634 = vadd.f32 %v532, %v602
        %v635 = vadd.f32 %v533, %v603
        %v636 = vadd.f32 %v534, %v604
        %v637 = vadd.f32 %v535, %v605
        %v638 = vadd.f32 %v536, %v606
        %v639 = vadd.f32 %v537, %v607
        %v640 = vadd.f32 %v538, %v608
        %v641 = vld [vmem:[%s2] sm:$0xff]
        %v642 = vld [vmem:[%s2 + $0x8] sm:$0xff]
        %s643 = sld [smem:[#allocation2 + $0x1]]
        %v644 = vrcp.pop 8.0
        %v645 = vmul.f32 8.0, %v644
        %v646 = vsub.f32 1.0, %v645
        %v647 = vmul.f32 %v644, %v646
        %v648 = vadd.f32 %v644, %v647
        %vm649 = vweird.f32 %v644
        %v650 = vsel %vm649, %v644, %v648
        %v651 = vmul.f32 %v207, %v650
        %v652 = vmul.f32 %v208, %v650
        %v653 = vfloor.f32 %v651
        %v654 = vfloor.f32 %v652
        %v655 = vsub.f32 %v651, %v653
        %v656 = vsub.f32 %v652, %v654
        %v657 = vcvt.f32.s32.to.zero.pseudo %v653
        %v658 = vcvt.f32.s32.to.zero.pseudo %v654
        %v659 = vmul.u32 %v658, 19349663
        %v660 = vxor.u32 %v657, %v659
        %v661 = vand.u32 %v660, 127
        %v662 = vsub.f32 1.0, %v655
        %v663 = vsub.f32 1.0, %v656
        %v664 = vmul.f32 %v662, %v663
        %v665 = vstv %s643
        %v666 = vmul.f32 %v664, %v665
        %v667 = vperm.slane %v661, 0
        %vm668 = vcmp.eq.s32.totalorder %v667, %v226
        %vm669 = vcmp.eq.s32.totalorder %v667, %v227
        %vm670 = vcmp.eq.s32.totalorder %v667, %v228
        %vm671 = vcmp.eq.s32.totalorder %v667, %v229
        %vm672 = vcmp.eq.s32.totalorder %v667, %v230
        %vm673 = vcmp.eq.s32.totalorder %v667, %v231
        %vm674 = vcmp.eq.s32.totalorder %v667, %v232
        %vm675 = vcmp.eq.s32.totalorder %v667, %v233
        %vm676 = vcmp.eq.s32.totalorder %v667, %v234
        %vm677 = vcmp.eq.s32.totalorder %v667, %v235
        %vm678 = vcmp.eq.s32.totalorder %v667, %v236
        %vm679 = vcmp.eq.s32.totalorder %v667, %v237
        %vm680 = vcmp.eq.s32.totalorder %v667, %v238
        %vm681 = vcmp.eq.s32.totalorder %v667, %v239
        %vm682 = vcmp.eq.s32.totalorder %v667, %v240
        %vm683 = vcmp.eq.s32.totalorder %v667, %v241
        %v684 = vperm.slane %v666, 0
        %v685 = vsel %vm668, %v684, 0.0
        %v686 = vsel %vm669, %v684, 0.0
        %v687 = vsel %vm670, %v684, 0.0
        %v688 = vsel %vm671, %v684, 0.0
        %v689 = vsel %vm672, %v684, 0.0
        %v690 = vsel %vm673, %v684, 0.0
        %v691 = vsel %vm674, %v684, 0.0
        %v692 = vsel %vm675, %v684, 0.0
        %v693 = vsel %vm676, %v684, 0.0
        %v694 = vsel %vm677, %v684, 0.0
        %v695 = vsel %vm678, %v684, 0.0
        %v696 = vsel %vm679, %v684, 0.0
        %v697 = vsel %vm680, %v684, 0.0
        %v698 = vsel %vm681, %v684, 0.0
        %v699 = vsel %vm682, %v684, 0.0
        %v700 = vsel %vm683, %v684, 0.0
        %v701 = vadd.s32 %v658, 1
        %v702 = vmul.u32 %v701, 19349663
        %v703 = vxor.u32 %v657, %v702
        %v704 = vand.u32 %v703, 127
        %v705 = vmul.f32 %v662, %v656
        %v706 = vmul.f32 %v705, %v665
        %v707 = vperm.slane %v704, 0
        %vm708 = vcmp.eq.s32.totalorder %v707, %v226
        %vm709 = vcmp.eq.s32.totalorder %v707, %v227
        %vm710 = vcmp.eq.s32.totalorder %v707, %v228
        %vm711 = vcmp.eq.s32.totalorder %v707, %v229
        %vm712 = vcmp.eq.s32.totalorder %v707, %v230
        %vm713 = vcmp.eq.s32.totalorder %v707, %v231
        %vm714 = vcmp.eq.s32.totalorder %v707, %v232
        %vm715 = vcmp.eq.s32.totalorder %v707, %v233
        %vm716 = vcmp.eq.s32.totalorder %v707, %v234
        %vm717 = vcmp.eq.s32.totalorder %v707, %v235
        %vm718 = vcmp.eq.s32.totalorder %v707, %v236
        %vm719 = vcmp.eq.s32.totalorder %v707, %v237
        %vm720 = vcmp.eq.s32.totalorder %v707, %v238
        %vm721 = vcmp.eq.s32.totalorder %v707, %v239
        %vm722 = vcmp.eq.s32.totalorder %v707, %v240
        %vm723 = vcmp.eq.s32.totalorder %v707, %v241
        %v724 = vperm.slane %v706, 0
        %v725 = vsel %vm708, %v724, 0.0
        %v726 = vsel %vm709, %v724, 0.0
        %v727 = vsel %vm710, %v724, 0.0
        %v728 = vsel %vm711, %v724, 0.0
        %v729 = vsel %vm712, %v724, 0.0
        %v730 = vsel %vm713, %v724, 0.0
        %v731 = vsel %vm714, %v724, 0.0
        %v732 = vsel %vm715, %v724, 0.0
        %v733 = vsel %vm716, %v724, 0.0
        %v734 = vsel %vm717, %v724, 0.0
        %v735 = vsel %vm718, %v724, 0.0
        %v736 = vsel %vm719, %v724, 0.0
        %v737 = vsel %vm720, %v724, 0.0
        %v738 = vsel %vm721, %v724, 0.0
        %v739 = vsel %vm722, %v724, 0.0
        %v740 = vsel %vm723, %v724, 0.0
        %v741 = vadd.f32 %v685, %v725
        %v742 = vadd.f32 %v686, %v726
        %v743 = vadd.f32 %v687, %v727
        %v744 = vadd.f32 %v688, %v728
        %v745 = vadd.f32 %v689, %v729
        %v746 = vadd.f32 %v690, %v730
        %v747 = vadd.f32 %v691, %v731
        %v748 = vadd.f32 %v692, %v732
        %v749 = vadd.f32 %v693, %v733
        %v750 = vadd.f32 %v694, %v734
        %v751 = vadd.f32 %v695, %v735
        %v752 = vadd.f32 %v696, %v736
        %v753 = vadd.f32 %v697, %v737
        %v754 = vadd.f32 %v698, %v738
        %v755 = vadd.f32 %v699, %v739
        %v756 = vadd.f32 %v700, %v740
        %v757 = vadd.s32 %v657, 1
        %v758 = vxor.u32 %v757, %v659
        %v759 = vand.u32 %v758, 127
        %v760 = vmul.f32 %v655, %v663
        %v761 = vmul.f32 %v760, %v665
        %v762 = vperm.slane %v759, 0
        %vm763 = vcmp.eq.s32.totalorder %v762, %v226
        %vm764 = vcmp.eq.s32.totalorder %v762, %v227
        %vm765 = vcmp.eq.s32.totalorder %v762, %v228
        %vm766 = vcmp.eq.s32.totalorder %v762, %v229
        %vm767 = vcmp.eq.s32.totalorder %v762, %v230
        %vm768 = vcmp.eq.s32.totalorder %v762, %v231
        %vm769 = vcmp.eq.s32.totalorder %v762, %v232
        %vm770 = vcmp.eq.s32.totalorder %v762, %v233
        %vm771 = vcmp.eq.s32.totalorder %v762, %v234
        %vm772 = vcmp.eq.s32.totalorder %v762, %v235
        %vm773 = vcmp.eq.s32.totalorder %v762, %v236
        %vm774 = vcmp.eq.s32.totalorder %v762, %v237
        %vm775 = vcmp.eq.s32.totalorder %v762, %v238
        %vm776 = vcmp.eq.s32.totalorder %v762, %v239
        %vm777 = vcmp.eq.s32.totalorder %v762, %v240
        %vm778 = vcmp.eq.s32.totalorder %v762, %v241
        %v779 = vperm.slane %v761, 0
        %v780 = vsel %vm763, %v779, 0.0
        %v781 = vsel %vm764, %v779, 0.0
        %v782 = vsel %vm765, %v779, 0.0
        %v783 = vsel %vm766, %v779, 0.0
        %v784 = vsel %vm767, %v779, 0.0
        %v785 = vsel %vm768, %v779, 0.0
        %v786 = vsel %vm769, %v779, 0.0
        %v787 = vsel %vm770, %v779, 0.0
        %v788 = vsel %vm771, %v779, 0.0
        %v789 = vsel %vm772, %v779, 0.0
        %v790 = vsel %vm773, %v779, 0.0
        %v791 = vsel %vm774, %v779, 0.0
        %v792 = vsel %vm775, %v779, 0.0
        %v793 = vsel %vm776, %v779, 0.0
        %v794 = vsel %vm777, %v779, 0.0
        %v795 = vsel %vm778, %v779, 0.0
        %v796 = vadd.f32 %v741, %v780
        %v797 = vadd.f32 %v742, %v781
        %v798 = vadd.f32 %v743, %v782
        %v799 = vadd.f32 %v744, %v783
        %v800 = vadd.f32 %v745, %v784
        %v801 = vadd.f32 %v746, %v785
        %v802 = vadd.f32 %v747, %v786
        %v803 = vadd.f32 %v748, %v787
        %v804 = vadd.f32 %v749, %v788
        %v805 = vadd.f32 %v750, %v789
        %v806 = vadd.f32 %v751, %v790
        %v807 = vadd.f32 %v752, %v791
        %v808 = vadd.f32 %v753, %v792
        %v809 = vadd.f32 %v754, %v793
        %v810 = vadd.f32 %v755, %v794
        %v811 = vadd.f32 %v756, %v795
        %v812 = vxor.u32 %v757, %v702
        %v813 = vand.u32 %v812, 127
        %v814 = vmul.f32 %v655, %v656
        %v815 = vmul.f32 %v814, %v665
        %v816 = vperm.slane %v813, 0
        %vm817 = vcmp.eq.s32.totalorder %v816, %v226
        %vm818 = vcmp.eq.s32.totalorder %v816, %v227
        %vm819 = vcmp.eq.s32.totalorder %v816, %v228
        %vm820 = vcmp.eq.s32.totalorder %v816, %v229
        %vm821 = vcmp.eq.s32.totalorder %v816, %v230
        %vm822 = vcmp.eq.s32.totalorder %v816, %v231
        %vm823 = vcmp.eq.s32.totalorder %v816, %v232
        %vm824 = vcmp.eq.s32.totalorder %v816, %v233
        %vm825 = vcmp.eq.s32.totalorder %v816, %v234
        %vm826 = vcmp.eq.s32.totalorder %v816, %v235
        %vm827 = vcmp.eq.s32.totalorder %v816, %v236
        %vm828 = vcmp.eq.s32.totalorder %v816, %v237
        %vm829 = vcmp.eq.s32.totalorder %v816, %v238
        %vm830 = vcmp.eq.s32.totalorder %v816, %v239
        %vm831 = vcmp.eq.s32.totalorder %v816, %v240
        %vm832 = vcmp.eq.s32.totalorder %v816, %v241
        %v833 = vperm.slane %v815, 0
        %v834 = vsel %vm817, %v833, 0.0
        %v835 = vsel %vm818, %v833, 0.0
        %v836 = vsel %vm819, %v833, 0.0
        %v837 = vsel %vm820, %v833, 0.0
        %v838 = vsel %vm821, %v833, 0.0
        %v839 = vsel %vm822, %v833, 0.0
        %v840 = vsel %vm823, %v833, 0.0
        %v841 = vsel %vm824, %v833, 0.0
        %v842 = vsel %vm825, %v833, 0.0
        %v843 = vsel %vm826, %v833, 0.0
        %v844 = vsel %vm827, %v833, 0.0
        %v845 = vsel %vm828, %v833, 0.0
        %v846 = vsel %vm829, %v833, 0.0
        %v847 = vsel %vm830, %v833, 0.0
        %v848 = vsel %vm831, %v833, 0.0
        %v849 = vsel %vm832, %v833, 0.0
        %v850 = vadd.f32 %v796, %v834
        %v851 = vadd.f32 %v797, %v835
        %v852 = vadd.f32 %v798, %v836
        %v853 = vadd.f32 %v799, %v837
        %v854 = vadd.f32 %v800, %v838
        %v855 = vadd.f32 %v801, %v839
        %v856 = vadd.f32 %v802, %v840
        %v857 = vadd.f32 %v803, %v841
        %v858 = vadd.f32 %v804, %v842
        %v859 = vadd.f32 %v805, %v843
        %v860 = vadd.f32 %v806, %v844
        %v861 = vadd.f32 %v807, %v845
        %v862 = vadd.f32 %v808, %v846
        %v863 = vadd.f32 %v809, %v847
        %v864 = vadd.f32 %v810, %v848
        %v865 = vadd.f32 %v811, %v849
        %v866 = vld [vmem:[%s3] sm:$0xff]
        %867 = vmatpush.msra.mxu0 %v865
        %868 = vmatpush.msra.mxu0 %v864
        %869 = vmatpush.msra.mxu0 %v863
        %870 = vmatpush.msra.mxu0 %v862
        %871 = vmatpush.msra.mxu0 %v861
        %872 = vmatpush.msra.mxu0 %v860
        %873 = vmatpush.msra.mxu0 %v859
        %874 = vmatpush.msra.mxu0 %v858
        %875 = vmatpush.msra.mxu0 %v857
        %876 = vmatpush.msra.mxu0 %v856
        %877 = vmatpush.msra.mxu0 %v855
        %878 = vmatpush.msra.mxu0 %v854
        %879 = vmatpush.msra.mxu0 %v853
        %880 = vmatpush.msra.mxu0 %v852
        %881 = vmatpush.msra.mxu0 %v851
        %882 = vmatpush.msra.mxu0 %v850
        %883 = vmatmul.f32.gmra.mxu0 %v866
        %v884 = vpop.f32.mrf.mxu0
        %v885 = vadd.f32 0.0, %v884
        %886 = vdwg.mxu0
        %887 = vmatpush.msra.mxu0 %v624
        %888 = vmatpush.msra.mxu0 %v623
        %889 = vmatpush.msra.mxu0 %v622
        %890 = vmatpush.msra.mxu0 %v621
        %891 = vmatpush.msra.mxu0 %v620
        %892 = vmatpush.msra.mxu0 %v619
        %893 = vmatpush.msra.mxu0 %v618
        %894 = vmatpush.msra.mxu0 %v617
        %895 = vmatpush.msra.mxu0 %v616
        %896 = vmatpush.msra.mxu0 %v615
        %897 = vmatpush.msra.mxu0 %v614
        %898 = vmatpush.msra.mxu0 %v613
        %899 = vmatpush.msra.mxu0 %v612
        %900 = vmatpush.msra.mxu0 %v611
        %901 = vmatpush.msra.mxu0 %v610
        %902 = vmatpush.msra.mxu0 %v609
        %903 = vmatmul.f32.gmra.mxu0 %v641
        %v904 = vpop.f32.mrf.mxu0
        %v905 = vadd.f32 %v885, %v904
        %906 = vdwg.mxu0
        %907 = vmatpush.msra.mxu0 %v640
        %908 = vmatpush.msra.mxu0 %v639
        %909 = vmatpush.msra.mxu0 %v638
        %910 = vmatpush.msra.mxu0 %v637
        %911 = vmatpush.msra.mxu0 %v636
        %912 = vmatpush.msra.mxu0 %v635
        %913 = vmatpush.msra.mxu0 %v634
        %914 = vmatpush.msra.mxu0 %v633
        %915 = vmatpush.msra.mxu0 %v632
        %916 = vmatpush.msra.mxu0 %v631
        %917 = vmatpush.msra.mxu0 %v630
        %918 = vmatpush.msra.mxu0 %v629
        %919 = vmatpush.msra.mxu0 %v628
        %920 = vmatpush.msra.mxu0 %v627
        %921 = vmatpush.msra.mxu0 %v626
        %922 = vmatpush.msra.mxu0 %v625
        %923 = vmatmul.f32.gmra.mxu0 %v642
        %v924 = vpop.f32.mrf.mxu0
        %v925 = vadd.f32 %v905, %v924
        %926 = vdwg.mxu0
        %927 = vst [vmem:[%s206] sm:$0xff] %v925
        %p928 = scmp.lt.s32.totalorder %s16, 7
        %s929 = scalar_select %p928, %s16, 7
        %s930 = smul.addr %s929, 8
        %s931 = scalar_lea.vmem %s4, %s930
        // Predicated region
        $region41: #{mrhg2d_forward.1} parent=35 // pred_check
          %p932 = pneg %p123
        $region42: #{mrhg2d_forward.1} parent=35 // pred_check_branch
          %934 = sbr.rel (%p932) target = $region44
        $region43: #{mrhg2d_forward.1} parent=35 // pred_region
          _
        $region44: #{mrhg2d_forward.1} parent=35 // pred_fallthru
          _
      $region36: #{mrhg2d_forward.1} parent=5 // pred_fallthru
        _
      %p935 = scmp.le.s32.totalorder 2, %s11
      // Predicated region
      $region45: #{mrhg2d_forward.1} parent=5 // pred_check
        %p936 = pneg %p935
      $region46: #{mrhg2d_forward.1} parent=5 // pred_check_branch
        %938 = sbr.rel (%p936) target = $region48
      $region47: #{mrhg2d_forward.1} parent=5 // pred_region
        %s939 = ssub.s32 %s11, 2
        // Predicated region
        $region49: #{mrhg2d_forward.1} parent=47 // pred_check
          %p940 = pneg %p129
        $region50: #{mrhg2d_forward.1} parent=47 // pred_check_branch
          %942 = sbr.rel (%p940) target = $region52
        $region51: #{mrhg2d_forward.1} parent=47 // pred_region
          %p943 = scmp.lt.s32.totalorder %s17, 7
          %s944 = scalar_select %p943, %s17, 7
          %s945 = smul.addr %s944, 8
          %s946 = scalar_lea.vmem %s4, %s945
        $region52: #{mrhg2d_forward.1} parent=47 // pred_fallthru
          _
      $region48: #{mrhg2d_forward.1} parent=5 // pred_fallthru
        _
    $region6: #{mrhg2d_forward.1} parent=1 // loop_footer
      %s15 = sadd.s32 1, %s11
    $region7: #{mrhg2d_forward.1} parent=1 // loop_footer_branch
      %10 = sbr.rel target = $region3
    $region8: #{mrhg2d_forward.1} parent=1 // loop_exit
      _
    %947 = vsyncpa [#allocation3], 1
    %s948 = scalar_lea.sflag [#allocation3], 1
    %949 = vsyncpa %s948, 1

</llo_original>
